<compile_context>
chip_gen: v7x
topology: tpu7x:2x2x1
jax: 0.10.0
libtpu: 0.0.40
codegen_flags: <defaults>
</compile_context>

<pallas_src>
import jax
import jax.numpy as jnp
from jax.experimental import pallas as pl
from jax.experimental.pallas import tpu as pltpu


def _l2kl_kernel(x_ref, sum_ref, max_ref, sum_acc, max_acc):
    """Processes one (TB, D) tile; grid = (num_cores, tiles_per_core)."""
    i = pl.program_id(1)

    @pl.when(i == 0)
    def _():
        sum_acc[...] = jnp.zeros_like(sum_acc)
        max_acc[...] = jnp.full_like(max_acc, -jnp.inf)

    x = x_ref[...].astype(jnp.float32)                      # (TB, D)
    rowsum = jnp.sum(x * x, axis=1, keepdims=True)          # (TB, 1)

    # Accumulation stays purely element-wise on the VPU; all cross-sublane
    # reduction and output stores are deferred to the last step.
    sum_acc[...] = sum_acc[...] + rowsum
    max_acc[...] = jnp.maximum(max_acc[...], rowsum)

    @pl.when(i == pl.num_programs(1) - 1)
    def _():
        # Broadcast the per-core scalars across a full (8, 128) tile so the
        # final store is a single unmasked, lane-dense vst.
        sum_ref[...] = jnp.broadcast_to(jnp.sum(sum_acc[...]), sum_ref.shape)
        max_ref[...] = jnp.broadcast_to(jnp.max(max_acc[...]), max_ref.shape)


def _choose_batch_tile(rows, feat, itemsize,
                       tile_byte_budget=4 * 1024 * 1024,
                       max_rows=2048):
    """Largest dtype-granularity divisor of `rows` whose (tile, feat) input
    buffer stays under `tile_byte_budget` (capped at `max_rows` so the (TB, 1)
    accumulator scratch stays small)."""
    sub = 8 * max(1, 4 // itemsize)          # f32 -> 8, bf16 -> 16, int8 -> 32
    if rows % sub != 0:
        return rows                          # single full-extent block (allowed)
    rows_by_bytes = max(sub, tile_byte_budget // max(1, feat * itemsize))
    target = min(rows, max_rows, rows_by_bytes)
    target = max(sub, (target // sub) * sub)
    best = sub
    for t in range(sub, target + 1, sub):
        if rows % t == 0:
            best = t
    return best


def l2_kl_loss(x, kl_tolerance=None, batch_tile=None):
    """Pallas implementation of L2KLLoss.forward.

    x: float array with ndim >= 2; per-sample term is sum of squares over dim=1
       (matching torch.sum(x ** 2, dim=1)).  Returns a scalar f32 loss.
    """
    assert x.ndim >= 2, "L2KLLoss expects at least 2-D input"
    D = x.shape[1]
    # Move the reduced axis (dim=1) last and flatten everything else into rows,
    # so each kernel row is one element of the PyTorch `kld_loss` tensor.
    # TODO(synk): for >2-D inputs this transpose costs one extra HBM pass; a
    # layout-native variant reducing over the middle axis would avoid it.
    x2d = jnp.moveaxis(x, 1, -1).reshape(-1, D) if x.ndim > 2 else x
    rows = x2d.shape[0]

    itemsize = jnp.dtype(x2d.dtype).itemsize
    sub = 8 * max(1, 4 // itemsize)
    if batch_tile is None:
        batch_tile = _choose_batch_tile(rows, D, itemsize)
    assert rows % batch_tile == 0
    assert batch_tile == rows or batch_tile % sub == 0, (
        "batch_tile must be a multiple of the sublane granularity "
        "(or the full row count)")

    num_tiles = rows // batch_tile
    # Leading "parallel" axis: lets v7x's two TensorCores each stream half the
    # tiles; runs sequentially (and correctly) on single-core chips.
    num_cores = 2 if (num_tiles >= 2 and num_tiles % 2 == 0) else 1
    tiles_per_core = num_tiles // num_cores

    tile_bytes = batch_tile * D * itemsize
    scratch_bytes = 2 * batch_tile * 128 * 4          # (TB, 1) pads lanes to 128
    out_bytes = 2 * 2 * 8 * 128 * 4                   # two (1, 8, 128) blocks, 2-buffered
    vmem_limit = int(min(56 * 1024 * 1024,
                         max(16 * 1024 * 1024,
                             2 * tile_bytes + scratch_bytes + out_bytes
                             + 4 * 1024 * 1024)))

    # TODO(synk): for very large D (an (8, D) f32 slab that cannot fit VMEM),
    # add an inner feature-axis grid with a running row-sum carried in scratch.

    sum_out, max_out = pl.pallas_call(
        _l2kl_kernel,
        out_shape=(
            jax.ShapeDtypeStruct((num_cores, 8, 128), jnp.float32),
            jax.ShapeDtypeStruct((num_cores, 8, 128), jnp.float32),
        ),
        grid_spec=pltpu.PrefetchScalarGridSpec(
            num_scalar_prefetch=0,
            grid=(num_cores, tiles_per_core),
            in_specs=[
                pl.BlockSpec((batch_tile, D),
                             lambda c, i: (c * tiles_per_core + i, 0)),
            ],
            out_specs=[
                pl.BlockSpec((1, 8, 128), lambda c, i: (c, 0, 0)),
                pl.BlockSpec((1, 8, 128), lambda c, i: (c, 0, 0)),
            ],
            scratch_shapes=[
                pltpu.VMEM((batch_tile, 1), jnp.float32),
                pltpu.VMEM((batch_tile, 1), jnp.float32),
            ],
        ),
        compiler_params=pltpu.CompilerParams(
            dimension_semantics=("parallel", "arbitrary"),
            vmem_limit_bytes=vmem_limit,
        ),
    )(x2d)

    per_core_sum = sum_out[:, 0, 0]                   # (num_cores,)
    per_core_max = max_out[:, 0, 0]                   # (num_cores,)
    mean_kld = jnp.sum(per_core_sum) / jnp.float32(rows)
    if kl_tolerance is None:
        return mean_kld
    # `kld_loss[kld_loss > tol]` is non-empty  <=>  max row-sum > tol.
    return jnp.where(jnp.max(per_core_max) > kl_tolerance,
                     mean_kld, jnp.float32(0.0))


def _reference_loss(x, kl_tolerance):
    """Pure-JAX reference mirroring the PyTorch module."""
    kld = jnp.sum(x.astype(jnp.float32) ** 2, axis=1)
    mean = jnp.mean(kld)
    if kl_tolerance is None:
        return mean
    return jnp.where(jnp.any(kld > kl_tolerance), mean, jnp.float32(0.0))


if __name__ == "__main__":
    key = jax.random.PRNGKey(0)
    k1, k2, k3, k4 = jax.random.split(key, 4)

    # 2-D latent case: (batch, hidden)
    x_2d = jax.random.normal(k1, (8, 32), dtype=jnp.float32)
    # >2-D case (sum is still over dim=1): (batch, channels, seq)
    x_3d = jax.random.normal(k2, (2, 4, 16), dtype=jnp.float32)
    # Multi-tile case: explicit batch_tile=8 -> 4 tiles -> 2-core grid path.
    x_tiled = jax.random.normal(k3, (32, 64), dtype=jnp.float32)
    # bf16 input (cast to f32 inside the kernel).
    x_bf16 = jax.random.normal(k4, (16, 32), dtype=jnp.float32).astype(jnp.bfloat16)

    cases = [
        (x_2d, None, None),    # tolerance disabled  -> mean
        (x_2d, 0.5, None),     # some rows above tol -> mean
        (x_2d, 1e6, None),     # no rows above tol   -> 0
        (x_3d, 10.0, None),
        (x_tiled, 1.0, 8),     # exercises multi-tile / 2-core accumulation
        (x_tiled, None, 8),
        (x_bf16, 1e6, None),
    ]
    for xx, tol, bt in cases:
        loss = jax.block_until_ready(l2_kl_loss(xx, kl_tolerance=tol,
                                                batch_tile=bt))
        ref = _reference_loss(xx, tol)
        assert jnp.allclose(loss, ref, atol=1e-4, rtol=1e-4), (tol, loss, ref)

    print("KERNEL_OK")
</pallas_src>

<mosaic_0001>
module attributes {stable_mosaic.version = 11 : i64} {
  func.func @_l2kl_kernel(%arg0: i32, %arg1: i32, %arg2: memref<8x32xf32, #tpu.memory_space<vmem>>, %arg3: memref<1x8x128xf32, #tpu.memory_space<vmem>>, %arg4: memref<1x8x128xf32, #tpu.memory_space<vmem>>, %arg5: memref<8x1xf32, #tpu.memory_space<vmem>>, %arg6: memref<8x1xf32, #tpu.memory_space<vmem>>) attributes {dimension_semantics = [#tpu.dimension_semantics<parallel>, #tpu.dimension_semantics<arbitrary>], iteration_bounds = array<i64: 1, 1>, scalar_prefetch = 0 : i64, scratch_operands = 2 : i64, tpu.core_type = #tpu.core_type<tc>, window_params = [{transform_indices = @transform_0, window_bounds = array<i64: 8, 32>}, {transform_indices = @transform_1, window_bounds = array<i64: 1, 8, 128>}, {transform_indices = @transform_2, window_bounds = array<i64: 1, 8, 128>}]} {
    %c0_i32 = arith.constant 0 : i32
    %0 = arith.cmpi eq, %arg1, %c0_i32 : i32
    %1 = arith.extui %0 : i1 to i32
    %c0_i32_0 = arith.constant 0 : i32
    %2 = arith.cmpi ne, %1, %c0_i32_0 : i32
    scf.if %2 {
      %cst_12 = arith.constant 0.000000e+00 : f32
      %16 = vector.broadcast %cst_12 : f32 to vector<8x1xf32>
      %c0_13 = arith.constant 0 : index
      %c0_14 = arith.constant 0 : index
      %17 = vector.load %arg5[%c0_13, %c0_14] : memref<8x1xf32, #tpu.memory_space<vmem>>, vector<8x1xf32>
      tpu.vector_store %arg5[%c0_13, %c0_14], %16 {strides = array<i32>} : memref<8x1xf32, #tpu.memory_space<vmem>>, vector<8x1xf32>,
      %cst_15 = arith.constant 0xFF800000 : f32
      %18 = vector.broadcast %cst_15 : f32 to vector<8x1xf32>
      %c0_16 = arith.constant 0 : index
      %c0_17 = arith.constant 0 : index
      %19 = vector.load %arg6[%c0_16, %c0_17] : memref<8x1xf32, #tpu.memory_space<vmem>>, vector<8x1xf32>
      tpu.vector_store %arg6[%c0_16, %c0_17], %18 {strides = array<i32>} : memref<8x1xf32, #tpu.memory_space<vmem>>, vector<8x1xf32>,
    } else {
    }
    %c0 = arith.constant 0 : index
    %c0_1 = arith.constant 0 : index
    %3 = vector.load %arg2[%c0, %c0_1] : memref<8x32xf32, #tpu.memory_space<vmem>>, vector<8x32xf32>
    %4 = arith.mulf %3, %3 : vector<8x32xf32>
    %cst = arith.constant dense<0.000000e+00> : vector<8xf32>
    %5 = vector.multi_reduction <add>, %4, %cst [1] : vector<8x32xf32> to vector<8xf32>
    %6 = vector.shape_cast %5 : vector<8xf32> to vector<8x1xf32>
    %c0_2 = arith.constant 0 : index
    %c0_3 = arith.constant 0 : index
    %7 = vector.load %arg5[%c0_2, %c0_3] : memref<8x1xf32, #tpu.memory_space<vmem>>, vector<8x1xf32>
    %8 = arith.addf %7, %6 : vector<8x1xf32>
    %c0_4 = arith.constant 0 : index
    %c0_5 = arith.constant 0 : index
    %9 = vector.load %arg5[%c0_4, %c0_5] : memref<8x1xf32, #tpu.memory_space<vmem>>, vector<8x1xf32>
    tpu.vector_store %arg5[%c0_4, %c0_5], %8 {strides = array<i32>} : memref<8x1xf32, #tpu.memory_space<vmem>>, vector<8x1xf32>,
    %c0_6 = arith.constant 0 : index
    %c0_7 = arith.constant 0 : index
    %10 = vector.load %arg6[%c0_6, %c0_7] : memref<8x1xf32, #tpu.memory_space<vmem>>, vector<8x1xf32>
    %11 = arith.maximumf %10, %6 : vector<8x1xf32>
    %c0_8 = arith.constant 0 : index
    %c0_9 = arith.constant 0 : index
    %12 = vector.load %arg6[%c0_8, %c0_9] : memref<8x1xf32, #tpu.memory_space<vmem>>, vector<8x1xf32>
    tpu.vector_store %arg6[%c0_8, %c0_9], %11 {strides = array<i32>} : memref<8x1xf32, #tpu.memory_space<vmem>>, vector<8x1xf32>,
    %c0_i32_10 = arith.constant 0 : i32
    %13 = arith.cmpi eq, %arg1, %c0_i32_10 : i32
    %14 = arith.extui %13 : i1 to i32
    %c0_i32_11 = arith.constant 0 : i32
    %15 = arith.cmpi ne, %14, %c0_i32_11 : i32
    scf.if %15 {
      %c0_12 = arith.constant 0 : index
      %c0_13 = arith.constant 0 : index
      %16 = vector.load %arg5[%c0_12, %c0_13] : memref<8x1xf32, #tpu.memory_space<vmem>>, vector<8x1xf32>
      %17 = vector.shape_cast %16 : vector<8x1xf32> to vector<1x8x1xf32>
      %cst_14 = arith.constant dense<0.000000e+00> : vector<1xf32>
      %18 = vector.multi_reduction <add>, %17, %cst_14 [1, 2] : vector<1x8x1xf32> to vector<1xf32>
      %19 = vector.shape_cast %18 : vector<1xf32> to vector<1x1x1xf32>
      %20 = vector.extract %19[0, 0, 0] : f32 from vector<1x1x1xf32>
      %21 = vector.broadcast %20 : f32 to vector<1x8x128xf32>
      %c0_15 = arith.constant 0 : index
      %c0_16 = arith.constant 0 : index
      %c0_17 = arith.constant 0 : index
      %22 = vector.load %arg3[%c0_15, %c0_16, %c0_17] : memref<1x8x128xf32, #tpu.memory_space<vmem>>, vector<1x8x128xf32>
      tpu.vector_store %arg3[%c0_15, %c0_16, %c0_17], %21 {strides = array<i32>} : memref<1x8x128xf32, #tpu.memory_space<vmem>>, vector<1x8x128xf32>,
      %c0_18 = arith.constant 0 : index
      %c0_19 = arith.constant 0 : index
      %23 = vector.load %arg6[%c0_18, %c0_19] : memref<8x1xf32, #tpu.memory_space<vmem>>, vector<8x1xf32>
      %24 = vector.shape_cast %23 : vector<8x1xf32> to vector<1x8x1xf32>
      %cst_20 = arith.constant dense<0xFF800000> : vector<1xf32>
      %25 = vector.multi_reduction <maximumf>, %24, %cst_20 [1, 2] : vector<1x8x1xf32> to vector<1xf32>
      %26 = vector.shape_cast %25 : vector<1xf32> to vector<1x1x1xf32>
      %27 = vector.extract %26[0, 0, 0] : f32 from vector<1x1x1xf32>
      %28 = vector.broadcast %27 : f32 to vector<1x8x128xf32>
      %c0_21 = arith.constant 0 : index
      %c0_22 = arith.constant 0 : index
      %c0_23 = arith.constant 0 : index
      %29 = vector.load %arg4[%c0_21, %c0_22, %c0_23] : memref<1x8x128xf32, #tpu.memory_space<vmem>>, vector<1x8x128xf32>
      tpu.vector_store %arg4[%c0_21, %c0_22, %c0_23], %28 {strides = array<i32>} : memref<1x8x128xf32, #tpu.memory_space<vmem>>, vector<1x8x128xf32>,
    } else {
    }
    return
  }
  func.func @transform_0(%arg0: i32, %arg1: i32) -> (i32, i32) {
    %c1_i32 = arith.constant 1 : i32
    %0 = arith.muli %arg0, %c1_i32 : i32
    %1 = arith.addi %0, %arg1 : i32
    %c0_i32 = arith.constant 0 : i32
    %c0_i32_0 = arith.constant 0 : i32
    return %1, %c0_i32 : i32, i32
  }
  func.func @transform_1(%arg0: i32, %arg1: i32) -> (i32, i32, i32) {
    %c0_i32 = arith.constant 0 : i32
    %c0_i32_0 = arith.constant 0 : i32
    %c0_i32_1 = arith.constant 0 : i32
    return %arg0, %c0_i32, %c0_i32_0 : i32, i32, i32
  }
  func.func @transform_2(%arg0: i32, %arg1: i32) -> (i32, i32, i32) {
    %c0_i32 = arith.constant 0 : i32
    %c0_i32_0 = arith.constant 0 : i32
    %c0_i32_1 = arith.constant 0 : i32
    return %arg0, %c0_i32, %c0_i32_0 : i32, i32, i32
  }
}

</mosaic_0001>

<llo_original>
// kernel: tpu_custom_call.1
$region0: #{tpu_custom_call.1}
  #allocation0 [shape = 'u32[]', space=smem, size = 0x4, offset = 0x4, fixed_abs, tag = 'smem constant byte address 0x4 - core index']
  #allocation1 [shape = 'u32[144,128]{1,0:T(1,128)}', space=vmem, size = 0x12000, scoped, tag = 'internal scratch']
  #allocation2 [shape = 'f32[8,1]{1,0:T(8,128)}', space=vmem, size = 0x1000, scoped, tag = 'scratch operand']
  #allocation3 [shape = 'f32[8,1]{1,0:T(8,128)}', space=vmem, size = 0x1000, scoped, tag = 'scratch operand']
  %s0 = inlined_call_operand.hbm [shape: f32[8,32], index: 0, kind: input, shape index: {}]
  %s1 = inlined_call_operand.hbm [shape: f32[1,8,128], index: 1, kind: output, shape index: {0}]
  %s2 = inlined_call_operand.hbm [shape: f32[1,8,128], index: 2, kind: output, shape index: {1}]
  %3 = xla_tuple %s1, %s2
  %s4 = sld [smem:[#allocation0]]
  $region34: #{tpu_custom_call.1} parent=0
    _
  %s6 = ssub.s32 1, %s4
  %s7 = scalar_select 0, %s6, %s4
  $region1: #{tpu_custom_call.1} parent=0
    #allocation4 [shape = 'u8[4096]{0}', space=vmem, size = 0x1000, scoped, tag = 'input window, operand 0, single buffered']
    #allocation5 [shape = 's32[1]{0}', space=sflag, size = 0x4, scoped, tag = 'scoped memory for tpu_custom_call.1']
    #allocation6 [shape = 's32[1]{0}', space=sflag, size = 0x4, scoped, tag = 'scoped memory for tpu_custom_call.1']
    #allocation7 [shape = 'u8[4096]{0}', space=vmem, size = 0x1000, scoped, tag = 'output window, operand 0, single buffered']
    #allocation8 [shape = 'u8[4096]{0}', space=vmem, size = 0x1000, scoped, tag = 'output window, operand 1, single buffered']
    #allocation9 [shape = 's32[1]{0}', space=sflag, size = 0x4, scoped, tag = 'scoped memory for tpu_custom_call.1']
    %8 = vsyncpa [#allocation5], 0
    %9 = vsyncpa [#allocation6], 0
    %10 = vsyncpa [#allocation9], 0
    // Predicated region
    $region2: #{tpu_custom_call.1} parent=1 // pred_check
      _
    $region3: #{tpu_custom_call.1} parent=1 // pred_check_branch
      %12 = sbr.rel (0) target = $region5
    $region4: #{tpu_custom_call.1} parent=1 // pred_region
      %s13 = sadd.s32 0, 0
      %s15 = ssub.s32 128, 128
      %16 = vsyncadd [#allocation5], %s15
      %s17 = smul.addr %s13, 128
      %s18 = scalar_lea.hbm %s0, %s17
      %s20 = sshll.u32 [#allocation4], 4
      %s21 = int_to_ptr.vmem [resolvable:$true] %s20
      %23 = dma.hbm_to_vmem [thread:$0]  %s18, 128, %s21, [#allocation5]
    $region5: #{tpu_custom_call.1} parent=1 // pred_fallthru
      _
    // Predicated region
    $region6: #{tpu_custom_call.1} parent=1 // pred_check
      _
    $region7: #{tpu_custom_call.1} parent=1 // pred_check_branch
      %25 = sbr.rel (0) target = $region9
    $region8: #{tpu_custom_call.1} parent=1 // pred_region
      %26 = dma.done [#allocation5], 128
    $region9: #{tpu_custom_call.1} parent=1 // pred_fallthru
      _
    %s27 = sadd.s32 0, 0
    %p28 = scmp.eq.s32.totalorder 0, 0
    // Predicated region
    $region10: #{tpu_custom_call.1} parent=1 // pred_check
      %p29 = pneg %p28
    $region11: #{tpu_custom_call.1} parent=1 // pred_check_branch
      %31 = sbr.rel (%p29) target = $region13
    $region12: #{tpu_custom_call.1} parent=1 // pred_region
      %vm32 = vcmask 7168
      %33 = vst.msk [vmem:[#allocation2] sm:$0xff] %vm32, 0.0
      %34 = vst.msk [vmem:[#allocation3] sm:$0xff] %vm32, -inf
    $region13: #{tpu_custom_call.1} parent=1 // pred_fallthru
      _
    %v35 = vld [vmem:[#allocation4] sm:$0xff]
    %v36 = vmul.f32 %v35, %v35
    %vm37 = vcmask 261120
    %v38 = vsel %vm37, %v36, 0.0
    %39 = vadd.xlane.f32.xlu0 %v38
    %v40 = vpop.xlane.xlu0 %39
    %v41 = vld [vmem:[#allocation2] sm:$0xff]
    %v42 = vadd.f32 %v41, %v40
    %vm43 = vcmask 7168
    %44 = vst.msk [vmem:[#allocation2] sm:$0xff] %vm43, %v42
    %v45 = vld [vmem:[#allocation3] sm:$0xff]
    %v46 = vmax.f32 %v45, %v40
    %47 = vst.msk [vmem:[#allocation3] sm:$0xff] %vm43, %v46
    // Predicated region
    $region14: #{tpu_custom_call.1} parent=1 // pred_check
      %p48 = pneg %p28
    $region15: #{tpu_custom_call.1} parent=1 // pred_check_branch
      %50 = sbr.rel (%p48) target = $region17
    $region16: #{tpu_custom_call.1} parent=1 // pred_region
      %v51 = vld [vmem:[#allocation2] sm:$0xff]
      %v52 = vsel %vm43, %v51, 0.0
      %53 = vadd.xlane.f32.xlu0 %v52
      %v54 = vpop.xlane.xlu0 %53
      %v55 = vrot.slane %v54, 4
      %v56 = vadd.f32 %v54, %v55
      %v57 = vrot.slane %v56, 2
      %v58 = vadd.f32 %v56, %v57
      %v59 = vrot.slane %v58, 1
      %v60 = vadd.f32 %v58, %v59
      %s61 = vtos %v60
      %v62 = vstv %s61
      %63 = vst [vmem:[#allocation7] sm:$0xff] %v62
      %v64 = vld [vmem:[#allocation3] sm:$0xff]
      %v65 = vsel %vm43, %v64, -inf
      %66 = vmax.xlane.f32.xlu0 %v65
      %v67 = vpop.xlane.xlu0 %66
      %v68 = vrot.slane %v67, 4
      %v69 = vmax.f32 %v67, %v68
      %v70 = vrot.slane %v69, 2
      %v71 = vmax.f32 %v69, %v70
      %v72 = vrot.slane %v71, 1
      %v73 = vmax.f32 %v71, %v72
      %s74 = vtos %v73
      %v75 = vstv %s74
      %76 = vst [vmem:[#allocation8] sm:$0xff] %v75
    $region17: #{tpu_custom_call.1} parent=1 // pred_fallthru
      _
    // Predicated region
    $region18: #{tpu_custom_call.1} parent=1 // pred_check
      _
    $region19: #{tpu_custom_call.1} parent=1 // pred_check_branch
      %78 = sbr.rel (0) target = $region21
    $region20: #{tpu_custom_call.1} parent=1 // pred_region
      %s80 = ssub.s32 128, 128
      %81 = vsyncadd [#allocation6], %s80
      %s83 = sshll.u32 [#allocation7], 4
      %s84 = int_to_ptr.vmem [resolvable:$true] %s83
      %86 = dma.vmem_to_hbm [thread:$0]  %s84, 128, %s1, [#allocation6]
    $region21: #{tpu_custom_call.1} parent=1 // pred_fallthru
      _
    // Predicated region
    $region22: #{tpu_custom_call.1} parent=1 // pred_check
      _
    $region23: #{tpu_custom_call.1} parent=1 // pred_check_branch
      %88 = sbr.rel (0) target = $region25
    $region24: #{tpu_custom_call.1} parent=1 // pred_region
      %s90 = ssub.s32 128, 128
      %91 = vsyncadd [#allocation9], %s90
      %s93 = sshll.u32 [#allocation8], 4
      %s94 = int_to_ptr.vmem [resolvable:$true] %s93
      %96 = dma.vmem_to_hbm [thread:$0]  %s94, 128, %s2, [#allocation9]
    $region25: #{tpu_custom_call.1} parent=1 // pred_fallthru
      _
    // Predicated region
    $region26: #{tpu_custom_call.1} parent=1 // pred_check
      _
    $region27: #{tpu_custom_call.1} parent=1 // pred_check_branch
      %98 = sbr.rel (0) target = $region29
    $region28: #{tpu_custom_call.1} parent=1 // pred_region
      %99 = dma.done [#allocation6], 128
    $region29: #{tpu_custom_call.1} parent=1 // pred_fallthru
      _
    // Predicated region
    $region30: #{tpu_custom_call.1} parent=1 // pred_check
      _
    $region31: #{tpu_custom_call.1} parent=1 // pred_check_branch
      %101 = sbr.rel (0) target = $region33
    $region32: #{tpu_custom_call.1} parent=1 // pred_region
      %102 = dma.done [#allocation9], 128
    $region33: #{tpu_custom_call.1} parent=1 // pred_fallthru
      _
    %103 = vsyncpa [#allocation5], 1
    %104 = vsyncpa [#allocation6], 1
    %105 = vsyncpa [#allocation9], 1

</llo_original>
